<compile_context>
chip_gen: v7x
topology: tpu7x:2x2x1
jax: 0.10.0
libtpu: 0.0.40
codegen_flags: <defaults>
</compile_context>

<pallas_src>
import jax
import jax.numpy as jnp
from jax.experimental import pallas as pl
from jax.experimental.pallas import tpu as pltpu


def se_kernel(x_ref, w1_ref, w2_ref, b1_ref, b2_ref, o_ref):
    # x_ref: (TB, C, HWp), lane-dense, lane axis padded with zeros to 128*k.
    # Squeeze: spatial sum with f32 accumulation. 1/true_HW is folded into w1.
    pooled = jnp.sum(x_ref[...], axis=-1, dtype=jnp.float32)          # (TB, C)

    # Excite: two tiny matmuls. Folded-BN scales are already inside w1/w2.
    y = jnp.dot(pooled, w1_ref[...], preferred_element_type=jnp.float32)
    y = jnp.maximum(y + b1_ref[...], 0.0)                             # BN shift + ReLU
    z = jnp.dot(y, w2_ref[...], preferred_element_type=jnp.float32)
    z = z + b2_ref[...]                                               # BN shift

    # hsigmoid: relu6(z + 3) / 6, cast to the activation dtype before the
    # only large elementwise pass (bf16-native VALUs on v6e/v7x).
    gate = (jnp.clip(z + 3.0, 0.0, 6.0) * (1.0 / 6.0)).astype(o_ref.dtype)

    # Channel-wise rescale. Re-read x_ref here instead of holding the block
    # live across the excite path (keeps vreg pressure low, no VMEM copy).
    o_ref[...] = (x_ref[...] * gate[:, :, None]).astype(o_ref.dtype)


def _pick_budgets():
    """Generation-aware (block_budget_bytes, vmem_limit_bytes)."""
    # Conservative default: safe on every generation (v5e's scoped default is
    # small; 4 MiB blocks already amortize the ~0.35us/step overhead at v5e BW).
    budget, vmem_limit = 4 * 1024 * 1024, 32 * 1024 * 1024
    vmem_cap = None
    try:
        vmem_cap = pltpu.get_tpu_info().vmem_capacity_bytes
    except Exception:
        pass
    kind = ""
    try:
        kind = jax.devices()[0].device_kind.lower()
    except Exception:
        pass
    if vmem_cap is not None:
        if vmem_cap <= 80 * 1024 * 1024:
            # v7x-class: 64 MiB physical VMEM per TC, 3.2 TB/s HBM.
            # 2 buffers x (in + out) x 8 MiB = 32 MiB << 48 MiB limit.
            budget, vmem_limit = 8 * 1024 * 1024, 48 * 1024 * 1024
        elif "v5" not in kind:
            # v6e-class: 128 MiB physical VMEM. 4 x 12 MiB = 48 MiB < 64 MiB.
            budget, vmem_limit = 12 * 1024 * 1024, 64 * 1024 * 1024
        # else: v5e keeps the conservative default (bigger blocks buy nothing
        # at ~0.82 TB/s and only risk the scoped-VMEM limit).
    return budget, vmem_limit


def se_module(x, w1, w2, scale1, shift1, scale2, shift2):
    """x: (N, C, H, W). w1: (Cr, C), w2: (C, Cr). scale*/shift*: folded BN params.

    Returns x * SE(x) with the same shape/dtype as x (inference-mode BN).
    """
    N, C, H, W = x.shape
    Cr = w1.shape[0]
    HW = H * W

    # Fold 1/HW and the BN scales into the pre-transposed 1x1-conv weights.
    #   mean(x) @ w1.T * s1 + b1  ==  sum(x) @ (w1.T * s1/HW) + b1
    #   y @ w2.T * s2 + b2        ==  y @ (w2.T * s2)         + b2
    w1t = (w1.T * (scale1 / HW)[None, :]).astype(jnp.float32)   # (C, Cr)
    w2t = (w2.T * scale2[None, :]).astype(jnp.float32)          # (Cr, C)
    b1 = shift1.reshape(1, Cr).astype(jnp.float32)
    b2 = shift2.reshape(1, C).astype(jnp.float32)

    # Lane-dense layout: (N, C, HW); pad HW to a multiple of 128 so the output
    # store stream is unmasked and the pooling sum never sees unspecified lanes
    # (zero pad is exact because 1/true_HW is folded into w1t above).
    hw_pad = (-HW) % 128
    HWp = HW + hw_pad

    budget, vmem_limit = _pick_budgets()

    itemsize = jnp.dtype(x.dtype).itemsize
    per_image_bytes = C * HWp * itemsize
    tb = max(1, budget // max(per_image_bytes, 1))
    if N >= 2:
        # Guarantee >= 2 grid steps so dimension_semantics=("parallel",) can
        # feed both TensorCores on v7x.
        tb = min(tb, pl.cdiv(N, 2))
    tb = min(tb, N)

    # cdiv-based grid: pad N to a multiple of tb instead of shrinking tb.
    n_pad = (-N) % tb
    Np = N + n_pad
    grid = Np // tb

    x2 = x.reshape(N, C, HW)
    if hw_pad or n_pad:
        x2 = jnp.pad(x2, ((0, n_pad), (0, 0), (0, hw_pad)))

    img_spec = pl.BlockSpec((tb, C, HWp), lambda n: (n, 0, 0))
    full2d = lambda shape: pl.BlockSpec(shape, lambda n: (0, 0))

    out2 = pl.pallas_call(
        se_kernel,
        out_shape=jax.ShapeDtypeStruct((Np, C, HWp), x.dtype),
        grid_spec=pltpu.PrefetchScalarGridSpec(
            num_scalar_prefetch=0,
            grid=(grid,),
            in_specs=[
                img_spec,              # x (TB, C, HWp)
                full2d((C, Cr)),       # w1^T * scale1/HW
                full2d((Cr, C)),       # w2^T * scale2
                full2d((1, Cr)),       # bn1 shift
                full2d((1, C)),        # bn2 shift
            ],
            out_specs=img_spec,
        ),
        compiler_params=pltpu.CompilerParams(
            dimension_semantics=("parallel",),
            vmem_limit_bytes=vmem_limit,
        ),
    )(x2, w1t, w2t, b1, b2)

    if hw_pad or n_pad:
        out2 = out2[:N, :, :HW]
    return out2.reshape(N, C, H, W)


def reference(x, w1, w2, scale1, shift1, scale2, shift2):
    pooled = jnp.mean(x, axis=(2, 3))                       # (N, C)
    y = pooled @ w1.T                                       # (N, Cr)
    y = y * scale1 + shift1
    y = jnp.maximum(y, 0.0)
    z = y @ w2.T                                            # (N, C)
    z = z * scale2 + shift2
    gate = jnp.clip(z + 3.0, 0.0, 6.0) / 6.0
    return x * gate[:, :, None, None]


if __name__ == "__main__":
    N, C, H, W = 2, 8, 16, 16
    reduction = 4
    Cr = C // reduction
    eps = 1e-5

    key = jax.random.PRNGKey(0)
    kx, kw1, kw2, kg1, kb1, kg2, kb2, km1, kv1, km2, kv2 = jax.random.split(key, 11)

    x = jax.random.normal(kx, (N, C, H, W), dtype=jnp.float32)

    # 1x1 conv weights (bias=False) -> plain (out, in) matrices
    w1 = jax.random.normal(kw1, (Cr, C), dtype=jnp.float32) * 0.5
    w2 = jax.random.normal(kw2, (C, Cr), dtype=jnp.float32) * 0.5

    # BatchNorm parameters (eval mode), folded into scale/shift
    gamma1 = 1.0 + 0.1 * jax.random.normal(kg1, (Cr,), dtype=jnp.float32)
    beta1 = 0.1 * jax.random.normal(kb1, (Cr,), dtype=jnp.float32)
    rmean1 = 0.1 * jax.random.normal(km1, (Cr,), dtype=jnp.float32)
    rvar1 = jnp.abs(1.0 + 0.1 * jax.random.normal(kv1, (Cr,), dtype=jnp.float32))

    gamma2 = 1.0 + 0.1 * jax.random.normal(kg2, (C,), dtype=jnp.float32)
    beta2 = 0.1 * jax.random.normal(kb2, (C,), dtype=jnp.float32)
    rmean2 = 0.1 * jax.random.normal(km2, (C,), dtype=jnp.float32)
    rvar2 = jnp.abs(1.0 + 0.1 * jax.random.normal(kv2, (C,), dtype=jnp.float32))

    scale1 = gamma1 / jnp.sqrt(rvar1 + eps)
    shift1 = beta1 - rmean1 * scale1
    scale2 = gamma2 / jnp.sqrt(rvar2 + eps)
    shift2 = beta2 - rmean2 * scale2

    out = se_module(x, w1, w2, scale1, shift1, scale2, shift2)
    out = jax.block_until_ready(out)

    ref = reference(x, w1, w2, scale1, shift1, scale2, shift2)
    assert out.shape == (N, C, H, W)
    assert jnp.allclose(out, ref, atol=1e-5, rtol=1e-5), "mismatch vs reference"

    print("KERNEL_OK")
</pallas_src>

<mosaic_0001>
module attributes {stable_mosaic.version = 11 : i64} {
  func.func @se_kernel(%arg0: i32, %arg1: memref<1x8x256xf32, #tpu.memory_space<vmem>>, %arg2: memref<8x2xf32, #tpu.memory_space<vmem>>, %arg3: memref<2x8xf32, #tpu.memory_space<vmem>>, %arg4: memref<1x2xf32, #tpu.memory_space<vmem>>, %arg5: memref<1x8xf32, #tpu.memory_space<vmem>>, %arg6: memref<1x8x256xf32, #tpu.memory_space<vmem>>) attributes {dimension_semantics = [#tpu.dimension_semantics<parallel>], iteration_bounds = array<i64: 2>, scalar_prefetch = 0 : i64, scratch_operands = 0 : i64, tpu.core_type = #tpu.core_type<tc>, window_params = [{transform_indices = @transform_0, window_bounds = array<i64: 1, 8, 256>}, {pipeline_mode = #tpu.pipeline_mode<synchronous>, transform_indices = @transform_1, window_bounds = array<i64: 8, 2>}, {pipeline_mode = #tpu.pipeline_mode<synchronous>, transform_indices = @transform_2, window_bounds = array<i64: 2, 8>}, {pipeline_mode = #tpu.pipeline_mode<synchronous>, transform_indices = @transform_3, window_bounds = array<i64: 1, 2>}, {pipeline_mode = #tpu.pipeline_mode<synchronous>, transform_indices = @transform_4, window_bounds = array<i64: 1, 8>}, {transform_indices = @transform_5, window_bounds = array<i64: 1, 8, 256>}]} {
    %c0 = arith.constant 0 : index
    %c0_0 = arith.constant 0 : index
    %c0_1 = arith.constant 0 : index
    %0 = vector.load %arg1[%c0, %c0_0, %c0_1] : memref<1x8x256xf32, #tpu.memory_space<vmem>>, vector<1x8x256xf32>
    %cst = arith.constant dense<0.000000e+00> : vector<1x8xf32>
    %1 = vector.multi_reduction <add>, %0, %cst [2] : vector<1x8x256xf32> to vector<1x8xf32>
    %c0_2 = arith.constant 0 : index
    %c0_3 = arith.constant 0 : index
    %2 = vector.load %arg2[%c0_2, %c0_3] : memref<8x2xf32, #tpu.memory_space<vmem>>, vector<8x2xf32>
    %cst_4 = arith.constant dense<0.000000e+00> : vector<1x2xf32>
    %3 = tpu.matmul %1, %2, %cst_4 {dimension_numbers = #tpu.dot_dimension_numbers<[1], [0], [0], [1], [0, 0, 1, 1], [], []>} : vector<1x8xf32>, vector<8x2xf32>, vector<1x2xf32> -> vector<1x2xf32>
    %c0_5 = arith.constant 0 : index
    %c0_6 = arith.constant 0 : index
    %4 = vector.load %arg4[%c0_5, %c0_6] : memref<1x2xf32, #tpu.memory_space<vmem>>, vector<1x2xf32>
    %5 = arith.addf %3, %4 : vector<1x2xf32>
    %cst_7 = arith.constant 0.000000e+00 : f32
    %6 = vector.broadcast %cst_7 : f32 to vector<1x2xf32>
    %7 = arith.maximumf %5, %6 : vector<1x2xf32>
    %c0_8 = arith.constant 0 : index
    %c0_9 = arith.constant 0 : index
    %8 = vector.load %arg3[%c0_8, %c0_9] : memref<2x8xf32, #tpu.memory_space<vmem>>, vector<2x8xf32>
    %cst_10 = arith.constant dense<0.000000e+00> : vector<1x8xf32>
    %9 = tpu.matmul %7, %8, %cst_10 {dimension_numbers = #tpu.dot_dimension_numbers<[1], [0], [0], [1], [0, 0, 1, 1], [], []>} : vector<1x2xf32>, vector<2x8xf32>, vector<1x8xf32> -> vector<1x8xf32>
    %c0_11 = arith.constant 0 : index
    %c0_12 = arith.constant 0 : index
    %10 = vector.load %arg5[%c0_11, %c0_12] : memref<1x8xf32, #tpu.memory_space<vmem>>, vector<1x8xf32>
    %11 = arith.addf %9, %10 : vector<1x8xf32>
    %cst_13 = arith.constant 3.000000e+00 : f32
    %12 = vector.broadcast %cst_13 : f32 to vector<1x8xf32>
    %13 = arith.addf %11, %12 : vector<1x8xf32>
    %cst_14 = arith.constant 0.000000e+00 : f32
    %cst_15 = arith.constant 6.000000e+00 : f32
    %14 = vector.broadcast %cst_14 : f32 to vector<1x8xf32>
    %15 = arith.maximumf %14, %13 : vector<1x8xf32>
    %16 = vector.broadcast %cst_15 : f32 to vector<1x8xf32>
    %17 = arith.minimumf %16, %15 : vector<1x8xf32>
    %cst_16 = arith.constant 0.166666672 : f32
    %18 = vector.broadcast %cst_16 : f32 to vector<1x8xf32>
    %19 = arith.mulf %17, %18 : vector<1x8xf32>
    %c0_17 = arith.constant 0 : index
    %c0_18 = arith.constant 0 : index
    %c0_19 = arith.constant 0 : index
    %20 = vector.load %arg1[%c0_17, %c0_18, %c0_19] : memref<1x8x256xf32, #tpu.memory_space<vmem>>, vector<1x8x256xf32>
    %21 = vector.shape_cast %19 : vector<1x8xf32> to vector<1x8x1xf32>
    %22 = vector.broadcast %21 : vector<1x8x1xf32> to vector<1x8x256xf32>
    %23 = arith.mulf %20, %22 : vector<1x8x256xf32>
    %c0_20 = arith.constant 0 : index
    %c0_21 = arith.constant 0 : index
    %c0_22 = arith.constant 0 : index
    %24 = vector.load %arg6[%c0_20, %c0_21, %c0_22] : memref<1x8x256xf32, #tpu.memory_space<vmem>>, vector<1x8x256xf32>
    tpu.vector_store %arg6[%c0_20, %c0_21, %c0_22], %23 {strides = array<i32>} : memref<1x8x256xf32, #tpu.memory_space<vmem>>, vector<1x8x256xf32>,
    return
  }
  func.func @transform_0(%arg0: i32) -> (i32, i32, i32) {
    %c0_i32 = arith.constant 0 : i32
    %c0_i32_0 = arith.constant 0 : i32
    %c0_i32_1 = arith.constant 0 : i32
    return %arg0, %c0_i32, %c0_i32_0 : i32, i32, i32
  }
  func.func @transform_1(%arg0: i32) -> (i32, i32) {
    %c0_i32 = arith.constant 0 : i32
    %c0_i32_0 = arith.constant 0 : i32
    %c0_i32_1 = arith.constant 0 : i32
    return %c0_i32, %c0_i32_0 : i32, i32
  }
  func.func @transform_2(%arg0: i32) -> (i32, i32) {
    %c0_i32 = arith.constant 0 : i32
    %c0_i32_0 = arith.constant 0 : i32
    %c0_i32_1 = arith.constant 0 : i32
    return %c0_i32, %c0_i32_0 : i32, i32
  }
  func.func @transform_3(%arg0: i32) -> (i32, i32) {
    %c0_i32 = arith.constant 0 : i32
    %c0_i32_0 = arith.constant 0 : i32
    %c0_i32_1 = arith.constant 0 : i32
    return %c0_i32, %c0_i32_0 : i32, i32
  }
  func.func @transform_4(%arg0: i32) -> (i32, i32) {
    %c0_i32 = arith.constant 0 : i32
    %c0_i32_0 = arith.constant 0 : i32
    %c0_i32_1 = arith.constant 0 : i32
    return %c0_i32, %c0_i32_0 : i32, i32
  }
  func.func @transform_5(%arg0: i32) -> (i32, i32, i32) {
    %c0_i32 = arith.constant 0 : i32
    %c0_i32_0 = arith.constant 0 : i32
    %c0_i32_1 = arith.constant 0 : i32
    return %arg0, %c0_i32, %c0_i32_0 : i32, i32, i32
  }
}

</mosaic_0001>

<llo_original>
// kernel: tpu_custom_call.1
$region0: #{tpu_custom_call.1}
  #allocation0 [shape = 'u32[]', space=smem, size = 0x4, offset = 0x4, fixed_abs, tag = 'smem constant byte address 0x4 - core index']
  #allocation1 [shape = 'u32[144,128]{1,0:T(1,128)}', space=vmem, size = 0x12000, scoped, tag = 'internal scratch']
  %s0 = inlined_call_operand.hbm [shape: f32[2,8,256], index: 0, kind: input, shape index: {}]
  %s1 = inlined_call_operand.vmem [shape: f32[8,2], index: 1, kind: input, shape index: {}]
  %s2 = inlined_call_operand.vmem [shape: f32[2,8], index: 2, kind: input, shape index: {}]
  %s3 = inlined_call_operand.vmem [shape: f32[1,2], index: 3, kind: input, shape index: {}]
  %s4 = inlined_call_operand.vmem [shape: f32[1,8], index: 4, kind: input, shape index: {}]
  %s5 = inlined_call_operand.hbm [shape: f32[2,8,256], index: 5, kind: output, shape index: {}]
  %s6 = sld [smem:[#allocation0]]
  $region57: #{tpu_custom_call.1} parent=0
    _
  %s8 = ssub.s32 1, %s6
  %s9 = scalar_select 0, %s8, %s6
  $region1: #{tpu_custom_call.1} parent=0
    #allocation2 [shape = 'u8[16384]{0}', space=vmem, size = 0x4000, scoped, tag = 'input window, operand 0']
    #allocation3 [shape = 's32[2]{0}', space=sflag, size = 0x8, scoped, tag = 'scoped memory for tpu_custom_call.1']
    #allocation4 [shape = 's32[2]{0}', space=sflag, size = 0x8, scoped, tag = 'scoped memory for tpu_custom_call.1']
    #allocation5 [shape = 'u8[16384]{0}', space=vmem, size = 0x4000, scoped, tag = 'output window, operand 0']
    %10 = vsyncpa [#allocation3], 0
    %s11 = scalar_lea.sflag [#allocation3], 1
    %12 = vsyncpa %s11, 0
    %13 = vsyncpa [#allocation4], 0
    %s14 = scalar_lea.sflag [#allocation4], 1
    %15 = vsyncpa %s14, 0
    loop: start=0, step=1, limit=4
    $region2: #{tpu_custom_call.1} parent=1 // loop_pre_header
      _
    $region3: #{tpu_custom_call.1} parent=1 // loop_header
      %s17 = sphi 0, %s21
      %p18 = scmp.ge.s32.totalorder %s17, 4
      %s27 = sphi 0, %s29
      %s30 = sphi 0, %s27
      %s31 = sphi 0, %s30
      %s47 = sphi 0, %s31
      %s51 = sphi 0, %s51
      %s53 = sphi 0, %s51
      %s54 = sphi 0, %s53
      %s68 = sphi 0, %s54
      %s72 = sphi 0, %s72
      %s74 = sphi 0, %s72
      %s75 = sphi 0, %s74
      %s89 = sphi 0, %s75
      %s93 = sphi 0, %s93
      %s95 = sphi 0, %s93
      %s96 = sphi 0, %s95
      %s110 = sphi 0, %s96
      %s114 = sphi 0, %s114
      %s116 = sphi 0, %s114
      %s117 = sphi 0, %s116
      %s131 = sphi 0, %s117
      %s137 = sphi 0, %s139
      %s140 = sphi 0, %s137
      %s141 = sphi 0, %s140
      %s157 = sphi 0, %s141
    $region4: #{tpu_custom_call.1} parent=1 // loop_header_branch
      %20 = sbr.rel (%p18) target = $region8
    $region5: #{tpu_custom_call.1} parent=1 // loop_body
      %s22 = ssub.s32 %s17, 1
      %s23 = ssub.s32 %s17, 2
      %s24 = sadd.s32 %s17, 1
      %s25 = ssub.s32 %s17, %s24
      %p26 = scmp.eq.s32.totalorder %s25, 0
      %s28 = sadd.s32 %s27, 1
      %s29 = scalar_select %p26, %s27, %s28
      %p32 = pneg %p26
      %p33 = scmp.eq.s32.totalorder %s17, 1
      %p34 = por %p32, %p33
      %p35 = scmp.ne.s32.totalorder %s27, %s30
      %p36 = scmp.eq.s32.totalorder %s17, 0
      %p37 = por %p35, %p36
      %p38 = scmp.ne.s32.totalorder %s27, %s30
      %p39 = scmp.eq.s32.totalorder %s22, 1
      %p40 = por %p38, %p39
      %p41 = scmp.ne.s32.totalorder %s30, %s31
      %p42 = scmp.eq.s32.totalorder %s22, 0
      %p43 = por %p41, %p42
      %p44 = scmp.ne.s32.totalorder %s30, %s31
      %p45 = scmp.eq.s32.totalorder %s23, 1
      %p46 = por %p44, %p45
      %p48 = scmp.ne.s32.totalorder %s31, %s47
      %p49 = scmp.eq.s32.totalorder %s23, 0
      %p50 = por %p48, %p49
      %s52 = sadd.s32 %s51, 1
      %p55 = scmp.eq.s32.totalorder %s17, 1
      %p56 = scmp.ne.s32.totalorder %s51, %s53
      %p57 = scmp.eq.s32.totalorder %s17, 0
      %p58 = por %p56, %p57
      %p59 = scmp.ne.s32.totalorder %s51, %s53
      %p60 = scmp.eq.s32.totalorder %s22, 1
      %p61 = por %p59, %p60
      %p62 = scmp.ne.s32.totalorder %s53, %s54
      %p63 = scmp.eq.s32.totalorder %s22, 0
      %p64 = por %p62, %p63
      %p65 = scmp.ne.s32.totalorder %s53, %s54
      %p66 = scmp.eq.s32.totalorder %s23, 1
      %p67 = por %p65, %p66
      %p69 = scmp.ne.s32.totalorder %s54, %s68
      %p70 = scmp.eq.s32.totalorder %s23, 0
      %p71 = por %p69, %p70
      %s73 = sadd.s32 %s72, 1
      %p76 = scmp.eq.s32.totalorder %s17, 1
      %p77 = scmp.ne.s32.totalorder %s72, %s74
      %p78 = scmp.eq.s32.totalorder %s17, 0
      %p79 = por %p77, %p78
      %p80 = scmp.ne.s32.totalorder %s72, %s74
      %p81 = scmp.eq.s32.totalorder %s22, 1
      %p82 = por %p80, %p81
      %p83 = scmp.ne.s32.totalorder %s74, %s75
      %p84 = scmp.eq.s32.totalorder %s22, 0
      %p85 = por %p83, %p84
      %p86 = scmp.ne.s32.totalorder %s74, %s75
      %p87 = scmp.eq.s32.totalorder %s23, 1
      %p88 = por %p86, %p87
      %p90 = scmp.ne.s32.totalorder %s75, %s89
      %p91 = scmp.eq.s32.totalorder %s23, 0
      %p92 = por %p90, %p91
      %s94 = sadd.s32 %s93, 1
      %p97 = scmp.eq.s32.totalorder %s17, 1
      %p98 = scmp.ne.s32.totalorder %s93, %s95
      %p99 = scmp.eq.s32.totalorder %s17, 0
      %p100 = por %p98, %p99
      %p101 = scmp.ne.s32.totalorder %s93, %s95
      %p102 = scmp.eq.s32.totalorder %s22, 1
      %p103 = por %p101, %p102
      %p104 = scmp.ne.s32.totalorder %s95, %s96
      %p105 = scmp.eq.s32.totalorder %s22, 0
      %p106 = por %p104, %p105
      %p107 = scmp.ne.s32.totalorder %s95, %s96
      %p108 = scmp.eq.s32.totalorder %s23, 1
      %p109 = por %p107, %p108
      %p111 = scmp.ne.s32.totalorder %s96, %s110
      %p112 = scmp.eq.s32.totalorder %s23, 0
      %p113 = por %p111, %p112
      %s115 = sadd.s32 %s114, 1
      %p118 = scmp.eq.s32.totalorder %s17, 1
      %p119 = scmp.ne.s32.totalorder %s114, %s116
      %p120 = scmp.eq.s32.totalorder %s17, 0
      %p121 = por %p119, %p120
      %p122 = scmp.ne.s32.totalorder %s114, %s116
      %p123 = scmp.eq.s32.totalorder %s22, 1
      %p124 = por %p122, %p123
      %p125 = scmp.ne.s32.totalorder %s116, %s117
      %p126 = scmp.eq.s32.totalorder %s22, 0
      %p127 = por %p125, %p126
      %p128 = scmp.ne.s32.totalorder %s116, %s117
      %p129 = scmp.eq.s32.totalorder %s23, 1
      %p130 = por %p128, %p129
      %p132 = scmp.ne.s32.totalorder %s117, %s131
      %p133 = scmp.eq.s32.totalorder %s23, 0
      %p134 = por %p132, %p133
      %s135 = ssub.s32 %s17, %s24
      %p136 = scmp.eq.s32.totalorder %s135, 0
      %s138 = sadd.s32 %s137, 1
      %s139 = scalar_select %p136, %s137, %s138
      %p142 = pneg %p136
      %p143 = scmp.eq.s32.totalorder %s17, 1
      %p144 = por %p142, %p143
      %p145 = scmp.ne.s32.totalorder %s137, %s140
      %p146 = scmp.eq.s32.totalorder %s17, 0
      %p147 = por %p145, %p146
      %p148 = scmp.ne.s32.totalorder %s137, %s140
      %p149 = scmp.eq.s32.totalorder %s22, 1
      %p150 = por %p148, %p149
      %p151 = scmp.ne.s32.totalorder %s140, %s141
      %p152 = scmp.eq.s32.totalorder %s22, 0
      %p153 = por %p151, %p152
      %p154 = scmp.ne.s32.totalorder %s140, %s141
      %p155 = scmp.eq.s32.totalorder %s23, 1
      %p156 = por %p154, %p155
      %p158 = scmp.ne.s32.totalorder %s141, %s157
      %p159 = scmp.eq.s32.totalorder %s23, 0
      %p160 = por %p158, %p159
      %p161 = scmp.le.s32.totalorder 1, %s17
      %p162 = scmp.lt.s32.totalorder %s17, 3
      %p163 = pnand %p161, %p162
      %p164 = pneg %p163
      // Predicated region
      $region9: #{tpu_custom_call.1} parent=5 // pred_check
        _
      $region10: #{tpu_custom_call.1} parent=5 // pred_check_branch
        %166 = sbr.rel (%p163) target = $region12
      $region11: #{tpu_custom_call.1} parent=5 // pred_region
        %s167 = ssub.s32 %s17, 1
        // Predicated region
        $region13: #{tpu_custom_call.1} parent=11 // pred_check
          %p168 = pneg %p64
        $region14: #{tpu_custom_call.1} parent=11 // pred_check_branch
          %170 = sbr.rel (%p168) target = $region16
        $region15: #{tpu_custom_call.1} parent=11 // pred_region
          _
        $region16: #{tpu_custom_call.1} parent=11 // pred_fallthru
          _
        // Predicated region
        $region17: #{tpu_custom_call.1} parent=11 // pred_check
          %p171 = pneg %p85
        $region18: #{tpu_custom_call.1} parent=11 // pred_check_branch
          %173 = sbr.rel (%p171) target = $region20
        $region19: #{tpu_custom_call.1} parent=11 // pred_region
          _
        $region20: #{tpu_custom_call.1} parent=11 // pred_fallthru
          _
        // Predicated region
        $region21: #{tpu_custom_call.1} parent=11 // pred_check
          %p174 = pneg %p106
        $region22: #{tpu_custom_call.1} parent=11 // pred_check_branch
          %176 = sbr.rel (%p174) target = $region24
        $region23: #{tpu_custom_call.1} parent=11 // pred_region
          _
        $region24: #{tpu_custom_call.1} parent=11 // pred_fallthru
          _
        // Predicated region
        $region25: #{tpu_custom_call.1} parent=11 // pred_check
          %p177 = pneg %p127
        $region26: #{tpu_custom_call.1} parent=11 // pred_check_branch
          %179 = sbr.rel (%p177) target = $region28
        $region27: #{tpu_custom_call.1} parent=11 // pred_region
          _
        $region28: #{tpu_custom_call.1} parent=11 // pred_fallthru
          _
      $region12: #{tpu_custom_call.1} parent=5 // pred_fallthru
        _
      %p180 = scmp.lt.s32.totalorder %s17, 2
      // Predicated region
      $region29: #{tpu_custom_call.1} parent=5 // pred_check
        %p181 = pneg %p180
      $region30: #{tpu_custom_call.1} parent=5 // pred_check_branch
        %183 = sbr.rel (%p181) target = $region32
      $region31: #{tpu_custom_call.1} parent=5 // pred_region
        // Predicated region
        $region33: #{tpu_custom_call.1} parent=31 // pred_check
          %p184 = pneg %p37
        $region34: #{tpu_custom_call.1} parent=31 // pred_check_branch
          %186 = sbr.rel (%p184) target = $region36
        $region35: #{tpu_custom_call.1} parent=31 // pred_region
          %s187 = sand.u32 %s27, 1
          %s188 = scalar_lea.sflag [#allocation3], %s187
          %s189 = sand.u32 %s27, 1
          %s190 = smul.addr %s189, 16
          %s191 = scalar_lea.vmem [#allocation2], %s190
          %s193 = ssub.s32 256, 256
          %194 = vsyncadd %s188, %s193
          %s195 = smul.addr %s17, 2
          %s196 = smul.addr %s195, 128
          %s197 = scalar_lea.hbm %s0, %s196
          %s199 = sshll.u32 %s191, 4
          %s200 = int_to_ptr.vmem [resolvable:$true] %s199
          %202 = dma.hbm_to_vmem [thread:$0]  %s197, 256, %s200, %s188
        $region36: #{tpu_custom_call.1} parent=31 // pred_fallthru
          _
      $region32: #{tpu_custom_call.1} parent=5 // pred_fallthru
        _
      %p203 = scmp.le.s32.totalorder 1, %s17
      %p204 = scmp.lt.s32.totalorder %s17, 3
      %p205 = pnand %p203, %p204
      %p206 = pneg %p205
      // Predicated region
      $region37: #{tpu_custom_call.1} parent=5 // pred_check
        _
      $region38: #{tpu_custom_call.1} parent=5 // pred_check_branch
        %208 = sbr.rel (%p205) target = $region40
      $region39: #{tpu_custom_call.1} parent=5 // pred_region
        %s209 = ssub.s32 %s17, 1
        %s210 = sand.u32 %s30, 1
        %s211 = scalar_lea.sflag [#allocation3], %s210
        %s212 = sand.u32 %s30, 1
        %s213 = smul.addr %s212, 16
        %s214 = scalar_lea.vmem [#allocation2], %s213
        // Predicated region
        $region41: #{tpu_custom_call.1} parent=39 // pred_check
          %p215 = pneg %p43
        $region42: #{tpu_custom_call.1} parent=39 // pred_check_branch
          %217 = sbr.rel (%p215) target = $region44
        $region43: #{tpu_custom_call.1} parent=39 // pred_region
          %218 = dma.done %s211, 256
        $region44: #{tpu_custom_call.1} parent=39 // pred_fallthru
          _
        %s219 = sand.u32 %s30, 1
        %s220 = scalar_lea.sflag [#allocation3], %s219
        %s221 = sand.u32 %s30, 1
        %s222 = smul.addr %s221, 16
        %s223 = scalar_lea.vmem [#allocation2], %s222
        %p224 = pneg %p43
        %p225 = pneg %p40
        %p226 = pneg %p64
        %p227 = pneg %p61
        %p228 = pneg %p85
        %p229 = pneg %p82
        %p230 = pneg %p106
        %p231 = pneg %p103
        %p232 = pneg %p127
        %p233 = pneg %p124
        %p234 = pneg %p153
        %p235 = pneg %p150
        %s236 = sand.u32 %s140, 1
        %s237 = scalar_lea.sflag [#allocation4], %s236
        %s238 = sand.u32 %s140, 1
        %s239 = smul.addr %s238, 16
        %s240 = scalar_lea.vmem [#allocation5], %s239
        %v241 = vld [vmem:[%s214] sm:$0xff]
        %v242 = vld [vmem:[%s214 + $0x8] sm:$0xff]
        %v243 = vadd.f32 %v241, %v242
        %244 = vadd.xlane.f32.xlu0 %v243
        %v245 = vpop.xlane.xlu0 %244
        %v246 = vld [vmem:[%s1] sm:$0xff]
        %v247 = vld [vmem:[%s3] sm:$0x1]
        %v249 = vlaneseq
        %v250 = vand.u32 %v249, 127
        %v251 = vlaneseq
        %v252 = vshrl.u32 %v251, 7
        %v253 = vsub.s32 %v250, %v252
        %v254 = vrot.slane %v245, %v253
        %vm255 = vcmask 64512
        %v256 = vsel %vm255, %v254, 0
        %258 = vmatprep.subr.mxu0 0.0
        %259 = vmatpush1.msra.mxu0 %v246
        %260 = vmatprep.subr.mxu0 0.0
        %261 = vmatpush1.msra.mxu0 0.0
        %262 = vmatprep.subr.mxu0 0.0
        %263 = vmatpush1.msra.mxu0 0.0
        %264 = vmatprep.subr.mxu0 0.0
        %265 = vmatpush1.msra.mxu0 0.0
        %266 = vmatprep.subr.mxu0 0.0
        %267 = vmatpush1.msra.mxu0 0.0
        %268 = vmatprep.subr.mxu0 0.0
        %269 = vmatpush1.msra.mxu0 0.0
        %270 = vmatprep.subr.mxu0 0.0
        %271 = vmatpush1.msra.mxu0 0.0
        %272 = vmatprep.subr.mxu0 0.0
        %273 = vmatpush1.msra.mxu0 0.0
        %274 = vmatprep.subr.mxu0 0.0
        %275 = vmatpush1.msra.mxu0 0.0
        %276 = vmatprep.subr.mxu0 0.0
        %277 = vmatpush1.msra.mxu0 0.0
        %278 = vmatprep.subr.mxu0 0.0
        %279 = vmatpush1.msra.mxu0 0.0
        %280 = vmatprep.subr.mxu0 0.0
        %281 = vmatpush1.msra.mxu0 0.0
        %282 = vmatprep.subr.mxu0 0.0
        %283 = vmatpush1.msra.mxu0 0.0
        %284 = vmatprep.subr.mxu0 0.0
        %285 = vmatpush1.msra.mxu0 0.0
        %286 = vmatprep.subr.mxu0 0.0
        %287 = vmatpush1.msra.mxu0 0.0
        %288 = vmatprep.subr.mxu0 0.0
        %289 = vmatpush1.msra.mxu0 0.0
        %290 = vmatprep.subr.mxu0 0.0
        %291 = vmatpush1.msra.mxu0 0.0
        %292 = vmatprep.subr.mxu0 0.0
        %293 = vmatpush1.msra.mxu0 0.0
        %294 = vmatprep.subr.mxu0 0.0
        %295 = vmatpush1.msra.mxu0 0.0
        %296 = vmatprep.subr.mxu0 0.0
        %297 = vmatpush1.msra.mxu0 0.0
        %298 = vmatprep.subr.mxu0 0.0
        %299 = vmatpush1.msra.mxu0 0.0
        %300 = vmatprep.subr.mxu0 0.0
        %301 = vmatpush1.msra.mxu0 0.0
        %302 = vmatprep.subr.mxu0 0.0
        %303 = vmatpush1.msra.mxu0 0.0
        %304 = vmatprep.subr.mxu0 0.0
        %305 = vmatpush1.msra.mxu0 0.0
        %306 = vmatprep.subr.mxu0 0.0
        %307 = vmatpush1.msra.mxu0 0.0
        %308 = vmatprep.subr.mxu0 0.0
        %309 = vmatpush1.msra.mxu0 0.0
        %310 = vmatprep.subr.mxu0 0.0
        %311 = vmatpush1.msra.mxu0 0.0
        %312 = vmatprep.subr.mxu0 0.0
        %313 = vmatpush1.msra.mxu0 0.0
        %314 = vmatprep.subr.mxu0 0.0
        %315 = vmatpush1.msra.mxu0 0.0
        %316 = vmatprep.subr.mxu0 0.0
        %317 = vmatpush1.msra.mxu0 0.0
        %318 = vmatprep.subr.mxu0 0.0
        %319 = vmatpush1.msra.mxu0 0.0
        %320 = vmatprep.subr.mxu0 0.0
        %321 = vmatpush1.msra.mxu0 0.0
        %322 = vmatprep.mubr.f32.mxu0 0.0
        %323 = vmatmul.mubr.f32.gmra.mrb[0].mxu0 %v256
        %v324 = vpop.f32.mrb[0].mxu0
        %v325 = vadd.f32 %v247, %v324
        %v326 = vpop.f32.mrb[0].mxu0
        %327 = vdwg.mxu0
        %v328 = vmax.f32 %v325, 0.0
        %v329 = vld [vmem:[%s2] sm:$0x3]
        %v330 = vld [vmem:[%s4] sm:$0x1]
        %vm331 = vcmask 15360
        %v333 = vsel %vm331, %v328, 0
        %vm335 = vcmask 1041408
        %v337 = vsel %vm335, %v329, 0
        %339 = vmatprep.subr.mxu0 0.0
        %340 = vmatpush1.msra.mxu0 %v337
        %341 = vmatprep.subr.mxu0 0.0
        %342 = vmatpush1.msra.mxu0 0.0
        %343 = vmatprep.subr.mxu0 0.0
        %344 = vmatpush1.msra.mxu0 0.0
        %345 = vmatprep.subr.mxu0 0.0
        %346 = vmatpush1.msra.mxu0 0.0
        %347 = vmatprep.subr.mxu0 0.0
        %348 = vmatpush1.msra.mxu0 0.0
        %349 = vmatprep.subr.mxu0 0.0
        %350 = vmatpush1.msra.mxu0 0.0
        %351 = vmatprep.subr.mxu0 0.0
        %352 = vmatpush1.msra.mxu0 0.0
        %353 = vmatprep.subr.mxu0 0.0
        %354 = vmatpush1.msra.mxu0 0.0
        %355 = vmatprep.subr.mxu0 0.0
        %356 = vmatpush1.msra.mxu0 0.0
        %357 = vmatprep.subr.mxu0 0.0
        %358 = vmatpush1.msra.mxu0 0.0
        %359 = vmatprep.subr.mxu0 0.0
        %360 = vmatpush1.msra.mxu0 0.0
        %361 = vmatprep.subr.mxu0 0.0
        %362 = vmatpush1.msra.mxu0 0.0
        %363 = vmatprep.subr.mxu0 0.0
        %364 = vmatpush1.msra.mxu0 0.0
        %365 = vmatprep.subr.mxu0 0.0
        %366 = vmatpush1.msra.mxu0 0.0
        %367 = vmatprep.subr.mxu0 0.0
        %368 = vmatpush1.msra.mxu0 0.0
        %369 = vmatprep.subr.mxu0 0.0
        %370 = vmatpush1.msra.mxu0 0.0
        %371 = vmatprep.subr.mxu0 0.0
        %372 = vmatpush1.msra.mxu0 0.0
        %373 = vmatprep.subr.mxu0 0.0
        %374 = vmatpush1.msra.mxu0 0.0
        %375 = vmatprep.subr.mxu0 0.0
        %376 = vmatpush1.msra.mxu0 0.0
        %377 = vmatprep.subr.mxu0 0.0
        %378 = vmatpush1.msra.mxu0 0.0
        %379 = vmatprep.subr.mxu0 0.0
        %380 = vmatpush1.msra.mxu0 0.0
        %381 = vmatprep.subr.mxu0 0.0
        %382 = vmatpush1.msra.mxu0 0.0
        %383 = vmatprep.subr.mxu0 0.0
        %384 = vmatpush1.msra.mxu0 0.0
        %385 = vmatprep.subr.mxu0 0.0
        %386 = vmatpush1.msra.mxu0 0.0
        %387 = vmatprep.subr.mxu0 0.0
        %388 = vmatpush1.msra.mxu0 0.0
        %389 = vmatprep.subr.mxu0 0.0
        %390 = vmatpush1.msra.mxu0 0.0
        %391 = vmatprep.subr.mxu0 0.0
        %392 = vmatpush1.msra.mxu0 0.0
        %393 = vmatprep.subr.mxu0 0.0
        %394 = vmatpush1.msra.mxu0 0.0
        %395 = vmatprep.subr.mxu0 0.0
        %396 = vmatpush1.msra.mxu0 0.0
        %397 = vmatprep.subr.mxu0 0.0
        %398 = vmatpush1.msra.mxu0 0.0
        %399 = vmatprep.subr.mxu0 0.0
        %400 = vmatpush1.msra.mxu0 0.0
        %401 = vmatprep.subr.mxu0 0.0
        %402 = vmatpush1.msra.mxu0 0.0
        %403 = vmatprep.mubr.f32.mxu0 0.0
        %404 = vmatmul.mubr.f32.gmra.mrb[0].mxu0 %v333
        %v405 = vpop.f32.mrb[0].mxu0
        %v406 = vadd.f32 %v330, %v405
        %v407 = vpop.f32.mrb[0].mxu0
        %408 = vdwg.mxu0
        %v409 = vadd.f32 %v406, 3.0
        %v410 = vmax.f32 %v409, 0.0
        %v411 = vmin.f32 %v410, 6.0
        %v412 = vmul.f32 %v411, 0.16666667
        %v413 = vlaneseq
        %v414 = vshrl.u32 %v413, 7
        %v415 = vsub.s32 0, %v414
        %v416 = vrot.slane %v412, %v415
        %418 = vbcast.lane.b32.xlu0 %v416, 256
        %v419 = vpop.permute.xlu0 %418
        %v420 = vmul.f32 %v241, %v419
        %v421 = vmul.f32 %v242, %v419
        %422 = vst [vmem:[%s240] sm:$0xff] %v420
        %423 = vst [vmem:[%s240 + $0x8] sm:$0xff] %v421
        %s424 = sand.u32 %s140, 1
        %s425 = scalar_lea.sflag [#allocation4], %s424
        %s426 = sand.u32 %s140, 1
        %s427 = smul.addr %s426, 16
        %s428 = scalar_lea.vmem [#allocation5], %s427
        // Predicated region
        $region45: #{tpu_custom_call.1} parent=39 // pred_check
          %p429 = pneg %p150
        $region46: #{tpu_custom_call.1} parent=39 // pred_check_branch
          %431 = sbr.rel (%p429) target = $region48
        $region47: #{tpu_custom_call.1} parent=39 // pred_region
          %s433 = ssub.s32 256, 256
          %434 = vsyncadd %s425, %s433
          %s435 = smul.addr %s22, 2
          %s436 = smul.addr %s435, 128
          %s437 = scalar_lea.hbm %s5, %s436
          %s439 = sshll.u32 %s428, 4
          %s440 = int_to_ptr.vmem [resolvable:$true] %s439
          %442 = dma.vmem_to_hbm [thread:$0]  %s440, 256, %s437, %s425
        $region48: #{tpu_custom_call.1} parent=39 // pred_fallthru
          _
      $region40: #{tpu_custom_call.1} parent=5 // pred_fallthru
        _
      %p443 = scmp.le.s32.totalorder 2, %s17
      // Predicated region
      $region49: #{tpu_custom_call.1} parent=5 // pred_check
        %p444 = pneg %p443
      $region50: #{tpu_custom_call.1} parent=5 // pred_check_branch
        %446 = sbr.rel (%p444) target = $region52
      $region51: #{tpu_custom_call.1} parent=5 // pred_region
        %s447 = ssub.s32 %s17, 2
        // Predicated region
        $region53: #{tpu_custom_call.1} parent=51 // pred_check
          %p448 = pneg %p156
        $region54: #{tpu_custom_call.1} parent=51 // pred_check_branch
          %450 = sbr.rel (%p448) target = $region56
        $region55: #{tpu_custom_call.1} parent=51 // pred_region
          %s451 = sand.u32 %s141, 1
          %s452 = scalar_lea.sflag [#allocation4], %s451
          %s453 = sand.u32 %s141, 1
          %s454 = smul.addr %s453, 16
          %s455 = scalar_lea.vmem [#allocation5], %s454
          %456 = dma.done %s452, 256
        $region56: #{tpu_custom_call.1} parent=51 // pred_fallthru
          _
      $region52: #{tpu_custom_call.1} parent=5 // pred_fallthru
        _
    $region6: #{tpu_custom_call.1} parent=1 // loop_footer
      %s21 = sadd.s32 1, %s17
    $region7: #{tpu_custom_call.1} parent=1 // loop_footer_branch
      %16 = sbr.rel target = $region3
    $region8: #{tpu_custom_call.1} parent=1 // loop_exit
      _
    %457 = vsyncpa [#allocation3], 1
    %s458 = scalar_lea.sflag [#allocation3], 1
    %459 = vsyncpa %s458, 1
    %460 = vsyncpa [#allocation4], 1
    %s461 = scalar_lea.sflag [#allocation4], 1
    %462 = vsyncpa %s461, 1

</llo_original>
